<compile_context>
chip_gen: v6e
topology: v6e:2x2x1
jax: 0.10.0
libtpu: 0.0.40
codegen_flags: <defaults>
</compile_context>

<pallas_src>
import math

import jax
import jax.numpy as jnp
from jax.experimental import pallas as pl
from jax.experimental.pallas import tpu as pltpu


# ----------------------------------------------------------------------------
# Fixed buffer (identical math to the PyTorch __init__).
# ----------------------------------------------------------------------------
def make_sinusoidal_pe(d_model: int, max_seq_length: int = 100,
                       dtype=jnp.float32) -> jnp.ndarray:
    position = jnp.arange(max_seq_length, dtype=jnp.float32)[:, None]      # (L, 1)
    div_term = jnp.exp(
        jnp.arange(0, d_model, 2, dtype=jnp.float32)
        * -(math.log(10000.0) / d_model)
    )                                                                       # (ceil(D/2),)
    angles = position * div_term                                            # (L, ceil(D/2))
    pe = jnp.zeros((max_seq_length, d_model), dtype=jnp.float32)
    pe = pe.at[:, 0::2].set(jnp.sin(angles))
    # Guard for odd d_model: cos fills only floor(D/2) columns.
    pe = pe.at[:, 1::2].set(jnp.cos(angles[:, : d_model // 2]))
    return pe.astype(dtype)                                                 # (L, D)


# ----------------------------------------------------------------------------
# Kernels.
# ----------------------------------------------------------------------------
def _pe_add_kernel_2d(x_ref, pe_ref, o_ref):
    # x_ref/o_ref: (tr, W)   pe_ref: (tr, W)  -- plain rank-2 add.
    o_ref[...] = (x_ref[...] + pe_ref[...]).astype(o_ref.dtype)


def _pe_add_kernel_3d(x_ref, pe_ref, o_ref):
    # x_ref/o_ref: (gb, tr, W)   pe_ref: (tr, W) broadcast over the batch group.
    o_ref[...] = (x_ref[...] + pe_ref[...][None, :, :]).astype(o_ref.dtype)


# ----------------------------------------------------------------------------
# Generation-aware sizing.
# ----------------------------------------------------------------------------
def _generation_budget():
    """Returns (target_block_bytes, vmem_cap_bytes) tuned per TPU generation."""
    try:
        kind = jax.devices()[0].device_kind.lower()
    except Exception:
        kind = ""
    vmem_cap = None
    try:
        vmem_cap = int(pltpu.get_tpu_info().vmem_capacity_bytes)
    except Exception:
        vmem_cap = None

    if ("v7" in kind) or ("tpu7" in kind):
        # 3.2 TB/s HBM: 6 MiB blocks cut the ~0.35 us/step overhead to <7%.
        # 64 MiB physical VMEM -> allow up to ~48 MiB live.
        cap = min(vmem_cap, 48 << 20) if vmem_cap else (48 << 20)
        return 6 << 20, cap
    if "v6" in kind:
        # 1.3-1.4 TB/s: 4 MiB blocks; 32 MiB scoped default, 128 MiB physical.
        return 4 << 20, (32 << 20)
    # v5e / unknown: 2 MiB already gives <7% step overhead at ~820 GB/s.
    # Physical VMEM is 128 MiB, so raising past the 16 MiB scoped default is safe.
    return 2 << 20, (32 << 20)


# ----------------------------------------------------------------------------
# Tiling helpers.
# ----------------------------------------------------------------------------
def _pick_lane_width(n_per_batch: int):
    """Largest lane-dense width (multiple of 128) dividing the flattened row."""
    for w in (8192, 4096, 2048, 1024, 512, 256, 128):
        if n_per_batch >= w and n_per_batch % w == 0:
            return w
    return None


def _sublane_align(itemsize: int) -> int:
    # f32 packs (8,128) per vreg, bf16 (16,128), int8/fp8 (32,128).  A row
    # tile aligned to the packed sublane count avoids masked sublane traffic
    # on the store path (the one vst slot binds this kernel's VMEM side).
    return {4: 8, 2: 16, 1: 32}.get(itemsize, 8)


def _pick_row_tile(num_rows: int, lane_w: int, itemsize: int,
                   target_bytes: int) -> int:
    align = _sublane_align(itemsize)
    target = max(align, target_bytes // max(lane_w * itemsize, 1))
    if num_rows <= target:
        return num_rows                          # full extent (always legal)
    start = max(align, (min(target, num_rows) // align) * align)
    for cand in range(start, 0, -align):         # dtype-aligned divisor
        if num_rows % cand == 0:
            return cand
    start8 = max(8, (min(target, num_rows) // 8) * 8)
    for cand in range(start8, 0, -8):            # any multiple-of-8 divisor
        if num_rows % cand == 0:
            return cand
    return num_rows                              # fall back to full extent


def _pick_batch_group(batch: int, row_tile_bytes: int, target_bytes: int) -> int:
    target = max(1, target_bytes // max(row_tile_bytes, 1))
    for cand in range(min(batch, target), 0, -1):   # divisor of batch
        if batch % cand == 0:
            return cand
    return 1


# ----------------------------------------------------------------------------
# Forward pass.
# ----------------------------------------------------------------------------
def sinusoidal_positional_encoding(
    x: jnp.ndarray,
    pe: jnp.ndarray,
    *,
    min_pallas_bytes: int = 256 * 1024,
    target_block_bytes: int | None = None,
) -> jnp.ndarray:
    """x: (B, S, D);  pe: (max_seq_length, D).  Returns x + pe[:S]."""
    B, S, D = x.shape
    pe_slice = pe[:S, :]                                 # static slice (glue)
    if pe_slice.dtype != x.dtype:
        # Prefer building pe in the model dtype once at setup
        # (make_sinusoidal_pe(..., dtype=model_dtype)) to avoid this cast.
        pe_slice = pe_slice.astype(x.dtype)

    itemsize = x.dtype.itemsize
    n_per_batch = S * D
    lane_w = _pick_lane_width(n_per_batch)

    # Tiny inputs, or a slab that cannot be re-viewed lane-dense: XLA's fused
    # add beats a masked-store Pallas kernel, so skip Pallas entirely.
    if x.size * itemsize < min_pallas_bytes or lane_w is None:
        return x + pe_slice[None, :, :]

    rows = n_per_batch // lane_w
    x2 = x.reshape(B, rows, lane_w)                      # layout-only reshape
    pe2 = pe_slice.reshape(rows, lane_w)

    # ---- tile sizes (generation-aware) ---------------------------------------
    tgt, vmem_cap = _generation_budget()
    if target_block_bytes is not None:
        tgt = target_block_bytes
    # Budget: 2 double-buffered x blocks + double-buffered out + 2 pe buffers
    # + headroom must fit the generation cap -> bound the per-block target.
    tgt = min(tgt, max((vmem_cap - (2 << 20)) // 6, 64 * 1024))

    tr = _pick_row_tile(rows, lane_w, itemsize, tgt)
    row_tile_bytes = tr * lane_w * itemsize
    gb = _pick_batch_group(B, row_tile_bytes, tgt)

    x_block_bytes = gb * row_tile_bytes
    vmem_need = 2 * (2 * x_block_bytes) + 2 * row_tile_bytes + (2 << 20)
    if vmem_need > vmem_cap:
        # Pathological shape (no friendly divisor): let XLA's fused add handle it
        # rather than under-provision VMEM.
        return x + pe_slice[None, :, :]

    grid = (rows // tr, B // gb)                         # batch axis last so the
                                                         # pe tile stays resident

    if gb == 1:
        kernel = _pe_add_kernel_2d
        x_block = (pl.Squeezed(), tr, lane_w)            # kernel sees (tr, W)
    else:
        kernel = _pe_add_kernel_3d
        x_block = (gb, tr, lane_w)

    x_spec = pl.BlockSpec(x_block, lambda r, g: (g, r, 0))
    pe_spec = pl.BlockSpec((tr, lane_w), lambda r, g: (r, 0))   # invariant in g
    out_spec = pl.BlockSpec(x_block, lambda r, g: (g, r, 0))

    # ---- compiler params / cost estimate -------------------------------------
    # Both axes are fully parallel (no reduction) so v7x's two TensorCores can
    # split the grid; on v5e/v6e this is a measured no-op.
    cp_kwargs = dict(dimension_semantics=("parallel", "parallel"))
    if vmem_need > (16 << 20):                           # v5e scoped default
        cp_kwargs["vmem_limit_bytes"] = int(min(vmem_need, vmem_cap))

    cost = pl.CostEstimate(
        flops=int(B * S * D),
        transcendentals=0,
        bytes_accessed=int(2 * B * S * D * itemsize + S * D * itemsize),
    )

    out2 = pl.pallas_call(
        kernel,
        out_shape=jax.ShapeDtypeStruct((B, rows, lane_w), x.dtype),
        grid_spec=pltpu.PrefetchScalarGridSpec(
            num_scalar_prefetch=0,
            grid=grid,
            in_specs=[x_spec, pe_spec],
            out_specs=out_spec,
        ),
        compiler_params=pltpu.CompilerParams(**cp_kwargs),
        cost_estimate=cost,
    )(x2, pe2)

    return out2.reshape(B, S, D)


# ----------------------------------------------------------------------------
# Demo / correctness checks.
# ----------------------------------------------------------------------------
if __name__ == "__main__":
    max_seq_length = 200

    def ref(x, pe):
        return x + pe[None, : x.shape[1], :].astype(x.dtype)

    key = jax.random.PRNGKey(0)
    k1, k2, k3, k4, k5 = jax.random.split(key, 5)

    # 1) Module-sized shape (B=2, S=8, D=32); force the Pallas path.
    #    Exercises the batch-grouped (rank-3) kernel, lane-dense W=256.
    x1 = jax.random.normal(k1, (2, 8, 32), dtype=jnp.float32)
    pe32 = make_sinusoidal_pe(32, max_seq_length)
    out1 = jax.block_until_ready(
        sinusoidal_positional_encoding(x1, pe32, min_pallas_bytes=0))
    assert out1.shape == x1.shape and out1.dtype == x1.dtype
    assert jnp.allclose(out1, ref(x1, pe32), atol=1e-6, rtol=1e-6)

    # 2) B=1: exercises the Squeezed batch-dim / rank-2 kernel.
    x2 = jax.random.normal(k2, (1, 8, 32), dtype=jnp.float32)
    out2 = jax.block_until_ready(
        sinusoidal_positional_encoding(x2, pe32, min_pallas_bytes=0))
    assert jnp.allclose(out2, ref(x2, pe32), atol=1e-6, rtol=1e-6)

    # 3) Multi-step grid in both axes (small target block forces tiling);
    #    verifies the row-tile / batch index maps and pe residency logic.
    x3 = jax.random.normal(k3, (2, 1024, 128), dtype=jnp.float32)
    pe128 = make_sinusoidal_pe(128, 1024)
    out3 = jax.block_until_ready(
        sinusoidal_positional_encoding(
            x3, pe128, min_pallas_bytes=0, target_block_bytes=256 * 1024))
    assert jnp.allclose(out3, ref(x3, pe128), atol=1e-6, rtol=1e-6)

    # 4) Batch-grouped (gb=4) rank-3 blocks.
    x4 = jax.random.normal(k4, (4, 8, 32), dtype=jnp.float32)
    out4 = jax.block_until_ready(
        sinusoidal_positional_encoding(x4, pe32, min_pallas_bytes=0))
    assert jnp.allclose(out4, ref(x4, pe32), atol=1e-6, rtol=1e-6)

    # 5) bf16 path: pe built directly in the model dtype (no per-call cast),
    #    dtype-aware sublane alignment exercised.
    x5 = jax.random.normal(k5, (2, 16, 64), dtype=jnp.float32).astype(jnp.bfloat16)
    pe64_bf16 = make_sinusoidal_pe(64, max_seq_length, dtype=jnp.bfloat16)
    out5 = jax.block_until_ready(
        sinusoidal_positional_encoding(x5, pe64_bf16, min_pallas_bytes=0))
    assert out5.dtype == jnp.bfloat16
    assert jnp.allclose(out5.astype(jnp.float32),
                        ref(x5, pe64_bf16).astype(jnp.float32),
                        atol=1e-2, rtol=1e-2)

    # 6) Default tiny-input fast path (plain XLA add) matches too.
    out6 = jax.block_until_ready(sinusoidal_positional_encoding(x1, pe32))
    assert jnp.allclose(out6, ref(x1, pe32), atol=1e-6, rtol=1e-6)

    print("KERNEL_OK")
</pallas_src>

<mosaic_0001>
module attributes {stable_mosaic.version = 11 : i64} {
  func.func @_pe_add_kernel_3d(%arg0: i32, %arg1: i32, %arg2: memref<2x1x256xf32, #tpu.memory_space<vmem>>, %arg3: memref<1x256xf32, #tpu.memory_space<vmem>>, %arg4: memref<2x1x256xf32, #tpu.memory_space<vmem>>) attributes {dimension_semantics = [#tpu.dimension_semantics<parallel>, #tpu.dimension_semantics<parallel>], iteration_bounds = array<i64: 1, 1>, scalar_prefetch = 0 : i64, scratch_operands = 0 : i64, tpu.core_type = #tpu.core_type<tc>, window_params = [{transform_indices = @transform_0, window_bounds = array<i64: 2, 1, 256>}, {transform_indices = @transform_1, window_bounds = array<i64: 1, 256>}, {transform_indices = @transform_2, window_bounds = array<i64: 2, 1, 256>}]} {
    %c0 = arith.constant 0 : index
    %c0_0 = arith.constant 0 : index
    %c0_1 = arith.constant 0 : index
    %0 = vector.load %arg2[%c0, %c0_0, %c0_1] : memref<2x1x256xf32, #tpu.memory_space<vmem>>, vector<2x1x256xf32>
    %c0_2 = arith.constant 0 : index
    %c0_3 = arith.constant 0 : index
    %1 = vector.load %arg3[%c0_2, %c0_3] : memref<1x256xf32, #tpu.memory_space<vmem>>, vector<1x256xf32>
    %2 = vector.shape_cast %1 : vector<1x256xf32> to vector<1x1x256xf32>
    %3 = vector.broadcast %2 : vector<1x1x256xf32> to vector<2x1x256xf32>
    %4 = arith.addf %0, %3 : vector<2x1x256xf32>
    %c0_4 = arith.constant 0 : index
    %c0_5 = arith.constant 0 : index
    %c0_6 = arith.constant 0 : index
    %5 = vector.load %arg4[%c0_4, %c0_5, %c0_6] : memref<2x1x256xf32, #tpu.memory_space<vmem>>, vector<2x1x256xf32>
    tpu.vector_store %arg4[%c0_4, %c0_5, %c0_6], %4 {strides = array<i32>} : memref<2x1x256xf32, #tpu.memory_space<vmem>>, vector<2x1x256xf32>,
    return
  }
  func.func @transform_0(%arg0: i32, %arg1: i32) -> (i32, i32, i32) {
    %c0_i32 = arith.constant 0 : i32
    %c0_i32_0 = arith.constant 0 : i32
    return %arg1, %arg0, %c0_i32 : i32, i32, i32
  }
  func.func @transform_1(%arg0: i32, %arg1: i32) -> (i32, i32) {
    %c0_i32 = arith.constant 0 : i32
    %c0_i32_0 = arith.constant 0 : i32
    return %arg0, %c0_i32 : i32, i32
  }
  func.func @transform_2(%arg0: i32, %arg1: i32) -> (i32, i32, i32) {
    %c0_i32 = arith.constant 0 : i32
    %c0_i32_0 = arith.constant 0 : i32
    return %arg1, %arg0, %c0_i32 : i32, i32, i32
  }
}

</mosaic_0001>

<llo_original>
// kernel: tpu_custom_call.1
$region0: #{tpu_custom_call.1}
  #allocation0 [shape = 'u32[]', space=smem, size = 0x4, offset = 0x4, fixed_abs, tag = 'smem constant byte address 0x4 - core index']
  #allocation1 [shape = 'u32[144,128]{1,0:T(1,128)}', space=vmem, size = 0x12000, scoped, tag = 'internal scratch']
  %s0 = inlined_call_operand.hbm [shape: f32[2,1,256], index: 0, kind: input, shape index: {}]
  %s1 = inlined_call_operand.hbm [shape: f32[1,256], index: 1, kind: input, shape index: {}]
  %s2 = inlined_call_operand.hbm [shape: f32[2,1,256], index: 2, kind: output, shape index: {}]
  %s3 = sld [smem:[#allocation0]]
  $region26: #{tpu_custom_call.1} parent=0
    _
  %s5 = ssub.s32 1, %s3
  %s6 = scalar_select 0, %s5, %s3
  $region1: #{tpu_custom_call.1} parent=0
    #allocation2 [shape = 'u8[2048]{0}', space=vmem, size = 0x800, scoped, tag = 'input window, operand 0, single buffered']
    #allocation3 [shape = 's32[1]{0}', space=sflag, size = 0x4, scoped, tag = 'scoped memory for tpu_custom_call.1']
    #allocation4 [shape = 's32[1]{0}', space=sflag, size = 0x4, scoped, tag = 'scoped memory for tpu_custom_call.1']
    #allocation5 [shape = 'u8[1024]{0}', space=vmem, size = 0x400, scoped, tag = 'input window, operand 1, single buffered']
    #allocation6 [shape = 's32[1]{0}', space=sflag, size = 0x4, scoped, tag = 'scoped memory for tpu_custom_call.1']
    #allocation7 [shape = 'u8[2048]{0}', space=vmem, size = 0x800, scoped, tag = 'output window, operand 0, single buffered']
    %7 = vsyncpa [#allocation3], 0
    %8 = vsyncpa [#allocation6], 0
    %9 = vsyncpa [#allocation4], 0
    // Predicated region
    $region2: #{tpu_custom_call.1} parent=1 // pred_check
      _
    $region3: #{tpu_custom_call.1} parent=1 // pred_check_branch
      %11 = sbr.rel (0) target = $region5
    $region4: #{tpu_custom_call.1} parent=1 // pred_region
      %s13 = ssub.s32 64, 64
      %14 = vsyncadd [#allocation3], %s13
      %s15 = sshll.u32 [#allocation2], 4
      %s16 = int_to_ptr.vmem [resolvable:$true] %s15
      %21 = dma.hbm_to_vmem [thread:$0]  %s0, 64, %s16, [#allocation3], 32, 32, 2
    $region5: #{tpu_custom_call.1} parent=1 // pred_fallthru
      _
    // Predicated region
    $region6: #{tpu_custom_call.1} parent=1 // pred_check
      _
    $region7: #{tpu_custom_call.1} parent=1 // pred_check_branch
      %23 = sbr.rel (0) target = $region9
    $region8: #{tpu_custom_call.1} parent=1 // pred_region
      %s25 = ssub.s32 32, 32
      %26 = vsyncadd [#allocation6], %s25
      %s28 = sshll.u32 [#allocation5], 4
      %s29 = int_to_ptr.vmem [resolvable:$true] %s28
      %31 = dma.hbm_to_vmem [thread:$0]  %s1, 32, %s29, [#allocation6]
    $region9: #{tpu_custom_call.1} parent=1 // pred_fallthru
      _
    // Predicated region
    $region10: #{tpu_custom_call.1} parent=1 // pred_check
      _
    $region11: #{tpu_custom_call.1} parent=1 // pred_check_branch
      %33 = sbr.rel (0) target = $region13
    $region12: #{tpu_custom_call.1} parent=1 // pred_region
      %34 = dma.done [#allocation3], 64
    $region13: #{tpu_custom_call.1} parent=1 // pred_fallthru
      _
    // Predicated region
    $region14: #{tpu_custom_call.1} parent=1 // pred_check
      _
    $region15: #{tpu_custom_call.1} parent=1 // pred_check_branch
      %36 = sbr.rel (0) target = $region17
    $region16: #{tpu_custom_call.1} parent=1 // pred_region
      %37 = dma.done [#allocation6], 32
    $region17: #{tpu_custom_call.1} parent=1 // pred_fallthru
      _
    %v38 = vld [vmem:[#allocation2] sm:$0x3]
    %v39 = vld [vmem:[#allocation2 + $0x2] sm:$0x3]
    %v40 = vld [vmem:[#allocation5] sm:$0x3]
    %v41 = vadd.f32 %v38, %v40
    %v42 = vadd.f32 %v39, %v40
    %v43 = vlaneseq
    %vm44 = vcmp.ge.s32.totalorder %v43, 0
    %vm45 = vcmp.lt.s32.totalorder %v43, 256
    %vm46 = vmand %vm44, %vm45
    %47 = vst.msk [vmem:[#allocation7] sm:$0x3] %vm46, %v41
    %48 = vst.msk [vmem:[#allocation7 + $0x2] sm:$0x3] %vm46, %v42
    // Predicated region
    $region18: #{tpu_custom_call.1} parent=1 // pred_check
      _
    $region19: #{tpu_custom_call.1} parent=1 // pred_check_branch
      %50 = sbr.rel (0) target = $region21
    $region20: #{tpu_custom_call.1} parent=1 // pred_region
      %s52 = ssub.s32 64, 64
      %53 = vsyncadd [#allocation4], %s52
      %s54 = sshll.u32 [#allocation7], 4
      %s55 = int_to_ptr.vmem [resolvable:$true] %s54
      %60 = dma.vmem_to_hbm [thread:$0]  %s55, 64, %s2, [#allocation4], 32, 32, 2
    $region21: #{tpu_custom_call.1} parent=1 // pred_fallthru
      _
    // Predicated region
    $region22: #{tpu_custom_call.1} parent=1 // pred_check
      _
    $region23: #{tpu_custom_call.1} parent=1 // pred_check_branch
      %62 = sbr.rel (0) target = $region25
    $region24: #{tpu_custom_call.1} parent=1 // pred_region
      %63 = dma.done [#allocation4], 64
    $region25: #{tpu_custom_call.1} parent=1 // pred_fallthru
      _
    %64 = vsyncpa [#allocation3], 1
    %65 = vsyncpa [#allocation6], 1
    %66 = vsyncpa [#allocation4], 1

</llo_original>
